<compile_context>
chip_gen: v7x
topology: tpu7x:2x2x1
jax: 0.10.0
libtpu: 0.0.40
codegen_flags: <defaults>
</compile_context>

<pallas_src>
import functools

import jax
import jax.numpy as jnp
from jax.experimental import pallas as pl
from jax.experimental.pallas import tpu as pltpu


def _bert_output_kernel(
    x_ref,      # (TILE_N, K)   native dtype   hidden_states tile
    w_ref,      # (K, H)        native dtype   dense weight (in x out layout)
    b_ref,      # (1, H)        f32            dense bias
    res_ref,    # (TILE_N, H)   native dtype   residual (input_tensor) tile
    gamma_ref,  # (1, H)        f32            LayerNorm weight
    beta_ref,   # (1, H)        f32            LayerNorm bias
    out_ref,    # (TILE_N, H)   native dtype   output tile
    *,
    eps: float,
):
    # Full-K matmul, f32 accumulation on the MXU.
    h = jnp.dot(x_ref[...], w_ref[...], preferred_element_type=jnp.float32)
    # dense bias + residual add (f32), then LayerNorm over the hidden axis.
    h = h + b_ref[...] + res_ref[...].astype(jnp.float32)
    mean = jnp.mean(h, axis=-1, keepdims=True)
    centered = h - mean
    var = jnp.mean(centered * centered, axis=-1, keepdims=True)
    normed = centered * jax.lax.rsqrt(var + eps)
    out_ref[...] = (normed * gamma_ref[...] + beta_ref[...]).astype(out_ref.dtype)


def _round_up(x: int, m: int) -> int:
    return ((x + m - 1) // m) * m


def _pick_tile_n(N: int, K: int, H: int, act_itemsize: int) -> int:
    """Largest token tile whose double-buffered activation footprint fits a
    conservative VMEM budget (W is resident on top of this)."""
    if N <= 512:
        # Small inputs: one tile covering all tokens (sublane-aligned).
        return _round_up(max(N, 8), 16)
    budget = 20 * 1024 * 1024  # activations only; W + headroom accounted outside
    for cand in (1024, 512, 256, 128):
        per_step = 2 * cand * (K + 2 * H) * act_itemsize  # x, res, out (double-buffered)
        if per_step <= budget:
            return cand
    return 128


def bert_output(
    hidden_states,   # (B, S, intermediate_size)
    input_tensor,    # (B, S, hidden_size)
    weight,          # (intermediate_size, hidden_size)  == torch weight.T
    bias,            # (hidden_size,)
    gamma,           # (hidden_size,)  LayerNorm weight
    beta,            # (hidden_size,)  LayerNorm bias
    *,
    eps: float = 1e-12,
):
    B, S, K = hidden_states.shape
    H = input_tensor.shape[-1]
    N = B * S

    # Native-dtype activations/weight (no wrapper upcast).
    x = hidden_states.reshape(N, K)
    res = input_tensor.reshape(N, H)
    w = weight
    out_dtype = input_tensor.dtype

    act_itemsize = max(x.dtype.itemsize, res.dtype.itemsize)
    tile_n = _pick_tile_n(N, K, H, act_itemsize)
    n_pad = _round_up(N, tile_n)

    # Token-axis padding only if the tile does not divide N (padded rows are
    # sliced off after the call; LayerNorm on them is harmless wasted work).
    if n_pad != N:
        x = jnp.pad(x, ((0, n_pad - N), (0, 0)))
        res = jnp.pad(res, ((0, n_pad - N), (0, 0)))

    # Small per-feature params stay f32 for a numerically clean epilogue.
    b2 = bias.reshape(1, H).astype(jnp.float32)
    g2 = gamma.reshape(1, H).astype(jnp.float32)
    be2 = beta.reshape(1, H).astype(jnp.float32)

    grid = (n_pad // tile_n,)

    # VMEM budget: resident W (x2 buffering to be safe) + double-buffered
    # x / res / out tiles + params, with headroom.
    est_vmem = (
        2 * K * H * w.dtype.itemsize
        + 2 * tile_n * K * x.dtype.itemsize
        + 2 * tile_n * H * res.dtype.itemsize
        + 2 * tile_n * H * jnp.dtype(out_dtype).itemsize
        + 6 * H * 4
    )
    vmem_limit = max(32 * 1024 * 1024, min(100 * 1024 * 1024, int(est_vmem * 1.3) + (2 << 20)))

    cost = pl.CostEstimate(
        flops=2 * n_pad * K * H,
        transcendentals=0,
        bytes_accessed=(
            n_pad * K * x.dtype.itemsize
            + K * H * w.dtype.itemsize
            + n_pad * H * res.dtype.itemsize
            + n_pad * H * jnp.dtype(out_dtype).itemsize
            + 3 * H * 4
        ),
    )

    out_flat = pl.pallas_call(
        functools.partial(_bert_output_kernel, eps=eps),
        out_shape=jax.ShapeDtypeStruct((n_pad, H), out_dtype),
        grid_spec=pltpu.PrefetchScalarGridSpec(
            num_scalar_prefetch=0,
            grid=grid,
            in_specs=[
                pl.BlockSpec((tile_n, K), lambda i: (i, 0)),  # x tile
                pl.BlockSpec((K, H), lambda i: (0, 0)),       # W (VMEM-resident)
                pl.BlockSpec((1, H), lambda i: (0, 0)),        # bias
                pl.BlockSpec((tile_n, H), lambda i: (i, 0)),   # residual tile
                pl.BlockSpec((1, H), lambda i: (0, 0)),        # gamma
                pl.BlockSpec((1, H), lambda i: (0, 0)),        # beta
            ],
            out_specs=pl.BlockSpec((tile_n, H), lambda i: (i, 0)),
        ),
        compiler_params=pltpu.CompilerParams(
            dimension_semantics=("parallel",),
            vmem_limit_bytes=vmem_limit,
        ),
        cost_estimate=cost,
    )(x, w, b2, res, g2, be2)

    if n_pad != N:
        out_flat = out_flat[:N]
    return out_flat.reshape(B, S, H)


def _reference(hidden_states, input_tensor, weight, bias, gamma, beta, eps):
    h = jnp.einsum(
        "bsk,kh->bsh",
        hidden_states.astype(jnp.float32),
        weight.astype(jnp.float32),
    ) + bias.astype(jnp.float32)
    h = h + input_tensor.astype(jnp.float32)
    mean = jnp.mean(h, axis=-1, keepdims=True)
    var = jnp.mean((h - mean) ** 2, axis=-1, keepdims=True)
    return (h - mean) * jax.lax.rsqrt(var + eps) * gamma.astype(jnp.float32) + beta.astype(
        jnp.float32
    )


if __name__ == "__main__":
    # Small config consistent with the module: hidden=32, intermediate=4*hidden.
    B, S, H = 2, 8, 32
    INTERMEDIATE = 4 * H  # 128
    EPS = 1e-12

    key = jax.random.PRNGKey(0)
    k_x, k_r, k_w, k_b = jax.random.split(key, 4)

    hidden_states = jax.random.normal(k_x, (B, S, INTERMEDIATE), jnp.float32)
    input_tensor = jax.random.normal(k_r, (B, S, H), jnp.float32)
    # Dense params stored as (in, out), i.e. torch Linear weight transposed.
    weight = 0.02 * jax.random.normal(k_w, (INTERMEDIATE, H), jnp.float32)
    bias = 0.02 * jax.random.normal(k_b, (H,), jnp.float32)
    gamma = jnp.ones((H,), jnp.float32)
    beta = jnp.zeros((H,), jnp.float32)

    # --- f32 path: tight tolerance against the reference -------------------
    out_f32 = bert_output(
        hidden_states, input_tensor, weight, bias, gamma, beta, eps=EPS
    )
    out_f32 = jax.block_until_ready(out_f32)
    ref = _reference(hidden_states, input_tensor, weight, bias, gamma, beta, EPS)
    assert out_f32.shape == (B, S, H)
    assert jnp.allclose(out_f32, ref, atol=1e-5, rtol=1e-5), (
        float(jnp.max(jnp.abs(out_f32 - ref)))
    )

    # --- bf16 path: native-dtype inputs, bf16 output, loose tolerance ------
    out_bf16 = bert_output(
        hidden_states.astype(jnp.bfloat16),
        input_tensor.astype(jnp.bfloat16),
        weight.astype(jnp.bfloat16),
        bias,
        gamma,
        beta,
        eps=EPS,
    )
    out_bf16 = jax.block_until_ready(out_bf16)
    assert out_bf16.dtype == jnp.bfloat16
    assert jnp.allclose(
        out_bf16.astype(jnp.float32), ref, atol=5e-2, rtol=5e-2
    ), float(jnp.max(jnp.abs(out_bf16.astype(jnp.float32) - ref)))

    # TODO(synk): training-mode dropout (hidden_dropout_prob) not applied;
    # forward here matches eval/inference semantics where dropout is identity.
    print("KERNEL_OK")
</pallas_src>

<mosaic_0001>
module attributes {stable_mosaic.version = 11 : i64} {
  func.func @_bert_output_kernel(%arg0: i32, %arg1: memref<16x128xf32, #tpu.memory_space<vmem>>, %arg2: memref<128x32xf32, #tpu.memory_space<vmem>>, %arg3: memref<1x32xf32, #tpu.memory_space<vmem>>, %arg4: memref<16x32xf32, #tpu.memory_space<vmem>>, %arg5: memref<1x32xf32, #tpu.memory_space<vmem>>, %arg6: memref<1x32xf32, #tpu.memory_space<vmem>>, %arg7: memref<16x32xf32, #tpu.memory_space<vmem>>) attributes {dimension_semantics = [#tpu.dimension_semantics<parallel>], iteration_bounds = array<i64: 1>, scalar_prefetch = 0 : i64, scratch_operands = 0 : i64, tpu.core_type = #tpu.core_type<tc>, window_params = [{transform_indices = @transform_0, window_bounds = array<i64: 16, 128>}, {pipeline_mode = #tpu.pipeline_mode<synchronous>, transform_indices = @transform_1, window_bounds = array<i64: 128, 32>}, {pipeline_mode = #tpu.pipeline_mode<synchronous>, transform_indices = @transform_2, window_bounds = array<i64: 1, 32>}, {transform_indices = @transform_3, window_bounds = array<i64: 16, 32>}, {pipeline_mode = #tpu.pipeline_mode<synchronous>, transform_indices = @transform_4, window_bounds = array<i64: 1, 32>}, {pipeline_mode = #tpu.pipeline_mode<synchronous>, transform_indices = @transform_5, window_bounds = array<i64: 1, 32>}, {transform_indices = @transform_6, window_bounds = array<i64: 16, 32>}]} {
    %c0 = arith.constant 0 : index
    %c0_0 = arith.constant 0 : index
    %0 = vector.load %arg1[%c0, %c0_0] : memref<16x128xf32, #tpu.memory_space<vmem>>, vector<16x128xf32>
    %c0_1 = arith.constant 0 : index
    %c0_2 = arith.constant 0 : index
    %1 = vector.load %arg2[%c0_1, %c0_2] : memref<128x32xf32, #tpu.memory_space<vmem>>, vector<128x32xf32>
    %cst = arith.constant dense<0.000000e+00> : vector<16x32xf32>
    %2 = tpu.matmul %0, %1, %cst {dimension_numbers = #tpu.dot_dimension_numbers<[1], [0], [0], [1], [0, 0, 1, 1], [], []>} : vector<16x128xf32>, vector<128x32xf32>, vector<16x32xf32> -> vector<16x32xf32>
    %c0_3 = arith.constant 0 : index
    %c0_4 = arith.constant 0 : index
    %3 = vector.load %arg3[%c0_3, %c0_4] : memref<1x32xf32, #tpu.memory_space<vmem>>, vector<1x32xf32>
    %4 = vector.broadcast %3 : vector<1x32xf32> to vector<16x32xf32>
    %5 = arith.addf %2, %4 : vector<16x32xf32>
    %c0_5 = arith.constant 0 : index
    %c0_6 = arith.constant 0 : index
    %6 = vector.load %arg4[%c0_5, %c0_6] : memref<16x32xf32, #tpu.memory_space<vmem>>, vector<16x32xf32>
    %7 = arith.addf %5, %6 : vector<16x32xf32>
    %cst_7 = arith.constant dense<0.000000e+00> : vector<16xf32>
    %8 = vector.multi_reduction <add>, %7, %cst_7 [1] : vector<16x32xf32> to vector<16xf32>
    %9 = vector.shape_cast %8 : vector<16xf32> to vector<16x1xf32>
    %cst_8 = arith.constant 3.200000e+01 : f32
    %10 = vector.broadcast %cst_8 : f32 to vector<16x1xf32>
    %11 = arith.divf %9, %10 : vector<16x1xf32>
    %12 = vector.broadcast %11 : vector<16x1xf32> to vector<16x32xf32>
    %13 = arith.subf %7, %12 : vector<16x32xf32>
    %14 = arith.mulf %13, %13 : vector<16x32xf32>
    %cst_9 = arith.constant dense<0.000000e+00> : vector<16xf32>
    %15 = vector.multi_reduction <add>, %14, %cst_9 [1] : vector<16x32xf32> to vector<16xf32>
    %16 = vector.shape_cast %15 : vector<16xf32> to vector<16x1xf32>
    %cst_10 = arith.constant 3.200000e+01 : f32
    %17 = vector.broadcast %cst_10 : f32 to vector<16x1xf32>
    %18 = arith.divf %16, %17 : vector<16x1xf32>
    %cst_11 = arith.constant 9.99999996E-13 : f32
    %19 = vector.broadcast %cst_11 : f32 to vector<16x1xf32>
    %20 = arith.addf %18, %19 : vector<16x1xf32>
    %21 = math.rsqrt %20 : vector<16x1xf32>
    %22 = vector.broadcast %21 : vector<16x1xf32> to vector<16x32xf32>
    %23 = arith.mulf %13, %22 : vector<16x32xf32>
    %c0_12 = arith.constant 0 : index
    %c0_13 = arith.constant 0 : index
    %24 = vector.load %arg5[%c0_12, %c0_13] : memref<1x32xf32, #tpu.memory_space<vmem>>, vector<1x32xf32>
    %25 = vector.broadcast %24 : vector<1x32xf32> to vector<16x32xf32>
    %26 = arith.mulf %23, %25 : vector<16x32xf32>
    %c0_14 = arith.constant 0 : index
    %c0_15 = arith.constant 0 : index
    %27 = vector.load %arg6[%c0_14, %c0_15] : memref<1x32xf32, #tpu.memory_space<vmem>>, vector<1x32xf32>
    %28 = vector.broadcast %27 : vector<1x32xf32> to vector<16x32xf32>
    %29 = arith.addf %26, %28 : vector<16x32xf32>
    %c0_16 = arith.constant 0 : index
    %c0_17 = arith.constant 0 : index
    %30 = vector.load %arg7[%c0_16, %c0_17] : memref<16x32xf32, #tpu.memory_space<vmem>>, vector<16x32xf32>
    tpu.vector_store %arg7[%c0_16, %c0_17], %29 {strides = array<i32>} : memref<16x32xf32, #tpu.memory_space<vmem>>, vector<16x32xf32>,
    return
  }
  func.func @transform_0(%arg0: i32) -> (i32, i32) {
    %c0_i32 = arith.constant 0 : i32
    %c0_i32_0 = arith.constant 0 : i32
    return %arg0, %c0_i32 : i32, i32
  }
  func.func @transform_1(%arg0: i32) -> (i32, i32) {
    %c0_i32 = arith.constant 0 : i32
    %c0_i32_0 = arith.constant 0 : i32
    %c0_i32_1 = arith.constant 0 : i32
    return %c0_i32, %c0_i32_0 : i32, i32
  }
  func.func @transform_2(%arg0: i32) -> (i32, i32) {
    %c0_i32 = arith.constant 0 : i32
    %c0_i32_0 = arith.constant 0 : i32
    %c0_i32_1 = arith.constant 0 : i32
    return %c0_i32, %c0_i32_0 : i32, i32
  }
  func.func @transform_3(%arg0: i32) -> (i32, i32) {
    %c0_i32 = arith.constant 0 : i32
    %c0_i32_0 = arith.constant 0 : i32
    return %arg0, %c0_i32 : i32, i32
  }
  func.func @transform_4(%arg0: i32) -> (i32, i32) {
    %c0_i32 = arith.constant 0 : i32
    %c0_i32_0 = arith.constant 0 : i32
    %c0_i32_1 = arith.constant 0 : i32
    return %c0_i32, %c0_i32_0 : i32, i32
  }
  func.func @transform_5(%arg0: i32) -> (i32, i32) {
    %c0_i32 = arith.constant 0 : i32
    %c0_i32_0 = arith.constant 0 : i32
    %c0_i32_1 = arith.constant 0 : i32
    return %c0_i32, %c0_i32_0 : i32, i32
  }
  func.func @transform_6(%arg0: i32) -> (i32, i32) {
    %c0_i32 = arith.constant 0 : i32
    %c0_i32_0 = arith.constant 0 : i32
    return %arg0, %c0_i32 : i32, i32
  }
}

</mosaic_0001>

<llo_original>
// kernel: tpu_custom_call.1
$region0: #{tpu_custom_call.1}
  #allocation0 [shape = 'u32[]', space=smem, size = 0x4, offset = 0x4, fixed_abs, tag = 'smem constant byte address 0x4 - core index']
  #allocation1 [shape = 'u32[144,128]{1,0:T(1,128)}', space=vmem, size = 0x12000, scoped, tag = 'internal scratch']
  %s0 = inlined_call_operand.vmem [shape: f32[16,128], index: 0, kind: input, shape index: {}]
  %s1 = inlined_call_operand.vmem [shape: f32[128,32], index: 1, kind: input, shape index: {}]
  %s2 = inlined_call_operand.vmem [shape: f32[1,32], index: 2, kind: input, shape index: {}]
  %s3 = inlined_call_operand.vmem [shape: f32[16,32], index: 3, kind: input, shape index: {}]
  %s4 = inlined_call_operand.vmem [shape: f32[1,32], index: 4, kind: input, shape index: {}]
  %s5 = inlined_call_operand.vmem [shape: f32[1,32], index: 5, kind: input, shape index: {}]
  %s6 = inlined_call_operand.hbm [shape: f32[16,32], index: 6, kind: output, shape index: {}]
  %s7 = sld [smem:[#allocation0]]
  $region34: #{tpu_custom_call.1} parent=0
    _
  %s9 = ssub.s32 1, %s7
  %s10 = scalar_select 0, %s9, %s7
  $region1: #{tpu_custom_call.1} parent=0
    #allocation2 [shape = 'u8[8192]{0}', space=vmem, size = 0x2000, scoped, tag = 'output window, operand 0, single buffered']
    #allocation3 [shape = 's32[1]{0}', space=sflag, size = 0x4, scoped, tag = 'scoped memory for tpu_custom_call.1']
    %11 = vsyncpa [#allocation3], 0
    // Predicated region
    $region2: #{tpu_custom_call.1} parent=1 // pred_check
      _
    $region3: #{tpu_custom_call.1} parent=1 // pred_check_branch
      %13 = sbr.rel (0) target = $region5
    $region4: #{tpu_custom_call.1} parent=1 // pred_region
      _
    $region5: #{tpu_custom_call.1} parent=1 // pred_fallthru
      _
    // Predicated region
    $region6: #{tpu_custom_call.1} parent=1 // pred_check
      _
    $region7: #{tpu_custom_call.1} parent=1 // pred_check_branch
      %15 = sbr.rel (0) target = $region9
    $region8: #{tpu_custom_call.1} parent=1 // pred_region
      _
    $region9: #{tpu_custom_call.1} parent=1 // pred_fallthru
      _
    // Predicated region
    $region10: #{tpu_custom_call.1} parent=1 // pred_check
      _
    $region11: #{tpu_custom_call.1} parent=1 // pred_check_branch
      %17 = sbr.rel (0) target = $region13
    $region12: #{tpu_custom_call.1} parent=1 // pred_region
      _
    $region13: #{tpu_custom_call.1} parent=1 // pred_fallthru
      _
    // Predicated region
    $region14: #{tpu_custom_call.1} parent=1 // pred_check
      _
    $region15: #{tpu_custom_call.1} parent=1 // pred_check_branch
      %19 = sbr.rel (0) target = $region17
    $region16: #{tpu_custom_call.1} parent=1 // pred_region
      _
    $region17: #{tpu_custom_call.1} parent=1 // pred_fallthru
      _
    // Predicated region
    $region18: #{tpu_custom_call.1} parent=1 // pred_check
      _
    $region19: #{tpu_custom_call.1} parent=1 // pred_check_branch
      %21 = sbr.rel (0) target = $region21
    $region20: #{tpu_custom_call.1} parent=1 // pred_region
      _
    $region21: #{tpu_custom_call.1} parent=1 // pred_fallthru
      _
    // Predicated region
    $region22: #{tpu_custom_call.1} parent=1 // pred_check
      _
    $region23: #{tpu_custom_call.1} parent=1 // pred_check_branch
      %23 = sbr.rel (0) target = $region25
    $region24: #{tpu_custom_call.1} parent=1 // pred_region
      _
    $region25: #{tpu_custom_call.1} parent=1 // pred_fallthru
      _
    %v24 = vld [vmem:[%s0] sm:$0xff]
    %v25 = vld [vmem:[%s0 + $0x8] sm:$0xff]
    %v26 = vld [vmem:[%s1] sm:$0xff]
    %v27 = vld [vmem:[%s1 + $0x8] sm:$0xff]
    %v28 = vld [vmem:[%s1 + $0x10] sm:$0xff]
    %v29 = vld [vmem:[%s1 + $0x18] sm:$0xff]
    %v30 = vld [vmem:[%s1 + $0x20] sm:$0xff]
    %v31 = vld [vmem:[%s1 + $0x28] sm:$0xff]
    %v32 = vld [vmem:[%s1 + $0x30] sm:$0xff]
    %v33 = vld [vmem:[%s1 + $0x38] sm:$0xff]
    %v34 = vld [vmem:[%s1 + $0x40] sm:$0xff]
    %v35 = vld [vmem:[%s1 + $0x48] sm:$0xff]
    %v36 = vld [vmem:[%s1 + $0x50] sm:$0xff]
    %v37 = vld [vmem:[%s1 + $0x58] sm:$0xff]
    %v38 = vld [vmem:[%s1 + $0x60] sm:$0xff]
    %v39 = vld [vmem:[%s1 + $0x68] sm:$0xff]
    %v40 = vld [vmem:[%s1 + $0x70] sm:$0xff]
    %v41 = vld [vmem:[%s1 + $0x78] sm:$0xff]
    %v42 = vld [vmem:[%s2] sm:$0x1]
    %v44 = vlaneseq
    %v45 = vshrl.u32 %v44, 7
    %v46 = vsub.s32 0, %v45
    %v47 = vrot.slane %v42, %v46
    %49 = vmatprep.subr.mxu0 0.0
    %50 = vmatpush1.msra.mxu0 %v26
    %51 = vmatprep.subr.mxu0 0.0
    %52 = vmatpush1.msra.mxu0 %v27
    %53 = vmatprep.subr.mxu0 0.0
    %54 = vmatpush1.msra.mxu0 %v28
    %55 = vmatprep.subr.mxu0 0.0
    %56 = vmatpush1.msra.mxu0 %v29
    %57 = vmatprep.subr.mxu0 0.0
    %58 = vmatpush1.msra.mxu0 %v30
    %59 = vmatprep.subr.mxu0 0.0
    %60 = vmatpush1.msra.mxu0 %v31
    %61 = vmatprep.subr.mxu0 0.0
    %62 = vmatpush1.msra.mxu0 %v32
    %63 = vmatprep.subr.mxu0 0.0
    %64 = vmatpush1.msra.mxu0 %v33
    %65 = vmatprep.subr.mxu0 0.0
    %66 = vmatpush1.msra.mxu0 %v34
    %67 = vmatprep.subr.mxu0 0.0
    %68 = vmatpush1.msra.mxu0 %v35
    %69 = vmatprep.subr.mxu0 0.0
    %70 = vmatpush1.msra.mxu0 %v36
    %71 = vmatprep.subr.mxu0 0.0
    %72 = vmatpush1.msra.mxu0 %v37
    %73 = vmatprep.subr.mxu0 0.0
    %74 = vmatpush1.msra.mxu0 %v38
    %75 = vmatprep.subr.mxu0 0.0
    %76 = vmatpush1.msra.mxu0 %v39
    %77 = vmatprep.subr.mxu0 0.0
    %78 = vmatpush1.msra.mxu0 %v40
    %79 = vmatprep.subr.mxu0 0.0
    %80 = vmatpush1.msra.mxu0 %v41
    %81 = vmatprep.subr.mxu0 0.0
    %82 = vmatpush1.msra.mxu0 0.0
    %83 = vmatprep.subr.mxu0 0.0
    %84 = vmatpush1.msra.mxu0 0.0
    %85 = vmatprep.subr.mxu0 0.0
    %86 = vmatpush1.msra.mxu0 0.0
    %87 = vmatprep.subr.mxu0 0.0
    %88 = vmatpush1.msra.mxu0 0.0
    %89 = vmatprep.subr.mxu0 0.0
    %90 = vmatpush1.msra.mxu0 0.0
    %91 = vmatprep.subr.mxu0 0.0
    %92 = vmatpush1.msra.mxu0 0.0
    %93 = vmatprep.subr.mxu0 0.0
    %94 = vmatpush1.msra.mxu0 0.0
    %95 = vmatprep.subr.mxu0 0.0
    %96 = vmatpush1.msra.mxu0 0.0
    %97 = vmatprep.subr.mxu0 0.0
    %98 = vmatpush1.msra.mxu0 0.0
    %99 = vmatprep.subr.mxu0 0.0
    %100 = vmatpush1.msra.mxu0 0.0
    %101 = vmatprep.subr.mxu0 0.0
    %102 = vmatpush1.msra.mxu0 0.0
    %103 = vmatprep.subr.mxu0 0.0
    %104 = vmatpush1.msra.mxu0 0.0
    %105 = vmatprep.subr.mxu0 0.0
    %106 = vmatpush1.msra.mxu0 0.0
    %107 = vmatprep.subr.mxu0 0.0
    %108 = vmatpush1.msra.mxu0 0.0
    %109 = vmatprep.subr.mxu0 0.0
    %110 = vmatpush1.msra.mxu0 0.0
    %111 = vmatprep.subr.mxu0 0.0
    %112 = vmatpush1.msra.mxu0 0.0
    %113 = vmatprep.mubr.f32.mxu0 0.0
    %114 = vmatmul.mubr.f32.gmra.mrb[0].mxu0 %v24
    %v115 = vpop.f32.mrb[0].mxu0
    %v116 = vadd.f32 %v47, %v115
    %v117 = vpop.f32.mrb[0].mxu0
    %118 = vmatprep.mubr.f32.mxu0 0.0
    %119 = vmatmul.mubr.f32.gmra.mrb[0].mxu0 %v25
    %v120 = vpop.f32.mrb[0].mxu0
    %v121 = vadd.f32 %v47, %v120
    %v122 = vpop.f32.mrb[0].mxu0
    %123 = vdwg.mxu0
    %v124 = vld [vmem:[%s3] sm:$0xff]
    %v125 = vld [vmem:[%s3 + $0x8] sm:$0xff]
    %v126 = vadd.f32 %v116, %v124
    %v127 = vadd.f32 %v121, %v125
    %vm128 = vcmask 261120
    %v129 = vsel %vm128, %v126, 0.0
    %130 = vadd.xlane.f32.xlu0 %v129
    %v131 = vpop.xlane.xlu0 %130
    %v132 = vsel %vm128, %v127, 0.0
    %133 = vadd.xlane.f32.xlu0 %v132
    %v134 = vpop.xlane.xlu0 %133
    %v135 = vrcp.pop 32.0
    %v136 = vmul.f32 %v131, %v135
    %v137 = vmul.f32 %v134, %v135
    %v138 = vsub.f32 %v126, %v136
    %v139 = vsub.f32 %v127, %v137
    %v140 = vmul.f32 %v138, %v138
    %v141 = vmul.f32 %v139, %v139
    %v142 = vsel %vm128, %v140, 0.0
    %143 = vadd.xlane.f32.xlu0 %v142
    %v144 = vpop.xlane.xlu0 %143
    %v145 = vsel %vm128, %v141, 0.0
    %146 = vadd.xlane.f32.xlu0 %v145
    %v147 = vpop.xlane.xlu0 %146
    %v148 = vmul.f32 %v144, %v135
    %v149 = vmul.f32 %v147, %v135
    %v150 = vadd.f32 %v148, 1e-12
    %v151 = vadd.f32 %v149, 1e-12
    %v152 = vrsqrt.pop %v150
    %v153 = vrsqrt.pop %v151
    %v154 = vmul.f32 %v138, %v152
    %v155 = vmul.f32 %v139, %v153
    %v156 = vld [vmem:[%s4] sm:$0x1]
    %v158 = vlaneseq
    %v159 = vshrl.u32 %v158, 7
    %v160 = vsub.s32 0, %v159
    %v161 = vrot.slane %v156, %v160
    %v163 = vmul.f32 %v154, %v161
    %v164 = vmul.f32 %v155, %v161
    %v165 = vld [vmem:[%s5] sm:$0x1]
    %v167 = vlaneseq
    %v168 = vshrl.u32 %v167, 7
    %v169 = vsub.s32 0, %v168
    %v170 = vrot.slane %v165, %v169
    %v172 = vadd.f32 %v163, %v170
    %v173 = vadd.f32 %v164, %v170
    %174 = vst.msk [vmem:[#allocation2] sm:$0xff] %vm128, %v172
    %175 = vst.msk [vmem:[#allocation2 + $0x8] sm:$0xff] %vm128, %v173
    // Predicated region
    $region26: #{tpu_custom_call.1} parent=1 // pred_check
      _
    $region27: #{tpu_custom_call.1} parent=1 // pred_check_branch
      %177 = sbr.rel (0) target = $region29
    $region28: #{tpu_custom_call.1} parent=1 // pred_region
      %s179 = ssub.s32 256, 256
      %180 = vsyncadd [#allocation3], %s179
      %s181 = sshll.u32 [#allocation2], 4
      %s182 = int_to_ptr.vmem [resolvable:$true] %s181
      %187 = dma.vmem_to_hbm [thread:$0]  %s182, 256, %s6, [#allocation3], 128, 128, 8
    $region29: #{tpu_custom_call.1} parent=1 // pred_fallthru
      _
    // Predicated region
    $region30: #{tpu_custom_call.1} parent=1 // pred_check
      _
    $region31: #{tpu_custom_call.1} parent=1 // pred_check_branch
      %189 = sbr.rel (0) target = $region33
    $region32: #{tpu_custom_call.1} parent=1 // pred_region
      %190 = dma.done [#allocation3], 256
    $region33: #{tpu_custom_call.1} parent=1 // pred_fallthru
      _
    %191 = vsyncpa [#allocation3], 1

</llo_original>
